<compile_context>
chip_gen: v7x
topology: tpu7x:2x2x1
jax: 0.10.0
libtpu: 0.0.40
codegen_flags: <defaults>
</compile_context>

<pallas_src>
import jax
import jax.numpy as jnp
from jax.experimental import pallas as pl
from jax.experimental.pallas import tpu as pltpu


def _round_up(n, m):
    return ((n + m - 1) // m) * m


def _dense_generator_kernel(x_ref, w_ref, b_ref, out_ref):
    """One output tile of the fused hyper-network mat-vec.

    x_ref:   (1, E)   bf16  task embedding (same block for every grid step)
    w_ref:   (E, TN)  bf16  fused [weight_gen | bias_gen] weights (pre-transposed)
    b_ref:   (1, TN)  f32   fused biases
    out_ref: (1, TN)  f32   fused output slab
    """
    acc = jnp.dot(x_ref[...], w_ref[...], preferred_element_type=jnp.float32)
    out_ref[...] = acc + b_ref[...]


def fuse_generator_params(w1_t, b1, w2_t, b2, tile_n=2048):
    """Builds the fused, lane-padded generator parameters (done once).

    w1_t: (E, d1)  weight_generator.weight^T      b1: (d1,)
    w2_t: (E, d2)  bias_generator.weight^T        b2: (d2,)
    Returns (w_fused (E, d_pad) bf16, b_fused (1, d_pad) f32, tile_n).
    """
    e, d1 = w1_t.shape
    d2 = w2_t.shape[1]
    d = d1 + d2
    # Tile must be a multiple of 128; don't exceed the (padded) total width.
    tn = min(tile_n, _round_up(d, 128))
    tn = _round_up(tn, 128)
    d_pad = _round_up(d, tn)

    w = jnp.zeros((e, d_pad), jnp.bfloat16)
    w = w.at[:, :d1].set(w1_t.astype(jnp.bfloat16))
    w = w.at[:, d1:d].set(w2_t.astype(jnp.bfloat16))

    b = jnp.zeros((1, d_pad), jnp.float32)
    b = b.at[0, :d1].set(b1.astype(jnp.float32))
    b = b.at[0, d1:d].set(b2.astype(jnp.float32))
    return w, b, tn


def dense_generator_forward(x, w_fused, b_fused, input_dim, output_dim, tile_n):
    """Runs the fused Pallas kernel and applies the .view() reshapes.

    x:        (E,) or (1, E) task embedding
    w_fused:  (E, d_pad) bf16   from fuse_generator_params
    b_fused:  (1, d_pad) f32    from fuse_generator_params
    Returns (weight: (input_dim, output_dim) f32, bias: (input_dim,) f32).
    """
    # TODO(synk): if many task embeddings are generated per step, batch them
    # as x: (B, E) to amortize the dominant weight-streaming cost.
    e, d_pad = w_fused.shape
    d1 = input_dim * output_dim
    d2 = input_dim
    grid = (d_pad // tile_n,)

    x2d = x.reshape(1, e).astype(jnp.bfloat16)

    cost = pl.CostEstimate(
        flops=2 * e * d_pad,
        transcendentals=0,
        bytes_accessed=(w_fused.size * 2        # bf16 weights
                        + b_fused.size * 4      # f32 biases
                        + x2d.size * 2          # bf16 embedding
                        + d_pad * 4),           # f32 output
    )

    out = pl.pallas_call(
        _dense_generator_kernel,
        out_shape=jax.ShapeDtypeStruct((1, d_pad), jnp.float32),
        grid_spec=pltpu.PrefetchScalarGridSpec(
            num_scalar_prefetch=0,
            grid=grid,
            in_specs=[
                pl.BlockSpec((1, e), lambda j: (0, 0)),        # x (broadcast)
                pl.BlockSpec((e, tile_n), lambda j: (0, j)),   # weight tile
                pl.BlockSpec((1, tile_n), lambda j: (0, j)),   # bias tile
            ],
            out_specs=pl.BlockSpec((1, tile_n), lambda j: (0, j)),
        ),
        compiler_params=pltpu.CompilerParams(
            dimension_semantics=("parallel",),
        ),
        cost_estimate=cost,
    )(x2d, w_fused, b_fused)

    # .view(input_dim, output_dim) and .view(-1) from the PyTorch forward.
    weight = out[0, :d1].reshape(input_dim, output_dim)
    bias = out[0, d1:d1 + d2]
    return weight, bias


if __name__ == "__main__":
    # Small, forward-consistent shapes (multiple grid steps are exercised).
    projected_source_embedding_dim = 32   # E
    input_dim = 8
    output_dim = 32

    key = jax.random.PRNGKey(0)
    k_x, k_w1, k_w2 = jax.random.split(key, 3)

    # Task embedding (the forward's `input`): a single vector of size E.
    x = jax.random.normal(k_x, (projected_source_embedding_dim,), jnp.float32)

    # Parameter init mirroring init_linear_layer: weight ~ Normal(std=0.01),
    # bias = 0. Stored pre-transposed as (E, D_out) for the (1,E)@(E,D) layout.
    std = 0.01
    w1_t = std * jax.random.normal(
        k_w1, (projected_source_embedding_dim, input_dim * output_dim),
        jnp.float32)
    b1 = jnp.zeros((input_dim * output_dim,), jnp.float32)
    w2_t = std * jax.random.normal(
        k_w2, (projected_source_embedding_dim, input_dim), jnp.float32)
    b2 = jnp.zeros((input_dim,), jnp.float32)

    # One-time setup: fuse + pad + downcast to bf16.
    # tile_n=128 here only to force a multi-step grid at these tiny demo
    # shapes; real adapter sizes should use tile_n=2048..8192.
    w_fused, b_fused, tile_n = fuse_generator_params(
        w1_t, b1, w2_t, b2, tile_n=128)

    weight, bias = dense_generator_forward(
        x, w_fused, b_fused, input_dim, output_dim, tile_n)
    weight = jax.block_until_ready(weight)
    bias = jax.block_until_ready(bias)

    # Reference check in plain JAX, using the same bf16-quantized params the
    # kernel consumes (f32 accumulation in both paths).
    xb = x.astype(jnp.bfloat16).astype(jnp.float32)[None, :]
    w1b = w1_t.astype(jnp.bfloat16).astype(jnp.float32)
    w2b = w2_t.astype(jnp.bfloat16).astype(jnp.float32)
    ref_w = (xb @ w1b + b1).reshape(input_dim, output_dim)
    ref_b = (xb @ w2b + b2).reshape(-1)

    assert weight.shape == (input_dim, output_dim)
    assert bias.shape == (input_dim,)
    assert jnp.allclose(weight, ref_w, atol=1e-4, rtol=1e-3)
    assert jnp.allclose(bias, ref_b, atol=1e-4, rtol=1e-3)

    print("KERNEL_OK")
</pallas_src>

<mosaic_0001>
module attributes {stable_mosaic.version = 11 : i64} {
  func.func @_dense_generator_kernel(%arg0: i32, %arg1: memref<1x32xbf16, #tpu.memory_space<vmem>>, %arg2: memref<32x128xbf16, #tpu.memory_space<vmem>>, %arg3: memref<1x128xf32, #tpu.memory_space<vmem>>, %arg4: memref<1x128xf32, #tpu.memory_space<vmem>>) attributes {dimension_semantics = [#tpu.dimension_semantics<parallel>], iteration_bounds = array<i64: 3>, scalar_prefetch = 0 : i64, scratch_operands = 0 : i64, tpu.core_type = #tpu.core_type<tc>, window_params = [{pipeline_mode = #tpu.pipeline_mode<synchronous>, transform_indices = @transform_0, window_bounds = array<i64: 1, 32>}, {transform_indices = @transform_1, window_bounds = array<i64: 32, 128>}, {transform_indices = @transform_2, window_bounds = array<i64: 1, 128>}, {transform_indices = @transform_3, window_bounds = array<i64: 1, 128>}]} {
    %c0 = arith.constant 0 : index
    %c0_0 = arith.constant 0 : index
    %0 = vector.load %arg1[%c0, %c0_0] : memref<1x32xbf16, #tpu.memory_space<vmem>>, vector<1x32xbf16>
    %c0_1 = arith.constant 0 : index
    %c0_2 = arith.constant 0 : index
    %1 = vector.load %arg2[%c0_1, %c0_2] : memref<32x128xbf16, #tpu.memory_space<vmem>>, vector<32x128xbf16>
    %cst = arith.constant dense<0.000000e+00> : vector<1x128xf32>
    %2 = tpu.matmul %0, %1, %cst {dimension_numbers = #tpu.dot_dimension_numbers<[1], [0], [0], [1], [0, 0, 1, 1], [], []>} : vector<1x32xbf16>, vector<32x128xbf16>, vector<1x128xf32> -> vector<1x128xf32>
    %c0_3 = arith.constant 0 : index
    %c0_4 = arith.constant 0 : index
    %3 = vector.load %arg3[%c0_3, %c0_4] : memref<1x128xf32, #tpu.memory_space<vmem>>, vector<1x128xf32>
    %4 = arith.addf %2, %3 : vector<1x128xf32>
    %c0_5 = arith.constant 0 : index
    %c0_6 = arith.constant 0 : index
    %5 = vector.load %arg4[%c0_5, %c0_6] : memref<1x128xf32, #tpu.memory_space<vmem>>, vector<1x128xf32>
    tpu.vector_store %arg4[%c0_5, %c0_6], %4 {strides = array<i32>} : memref<1x128xf32, #tpu.memory_space<vmem>>, vector<1x128xf32>,
    return
  }
  func.func @transform_0(%arg0: i32) -> (i32, i32) {
    %c0_i32 = arith.constant 0 : i32
    %c0_i32_0 = arith.constant 0 : i32
    %c0_i32_1 = arith.constant 0 : i32
    return %c0_i32, %c0_i32_0 : i32, i32
  }
  func.func @transform_1(%arg0: i32) -> (i32, i32) {
    %c0_i32 = arith.constant 0 : i32
    %c0_i32_0 = arith.constant 0 : i32
    return %c0_i32, %arg0 : i32, i32
  }
  func.func @transform_2(%arg0: i32) -> (i32, i32) {
    %c0_i32 = arith.constant 0 : i32
    %c0_i32_0 = arith.constant 0 : i32
    return %c0_i32, %arg0 : i32, i32
  }
  func.func @transform_3(%arg0: i32) -> (i32, i32) {
    %c0_i32 = arith.constant 0 : i32
    %c0_i32_0 = arith.constant 0 : i32
    return %c0_i32, %arg0 : i32, i32
  }
}

</mosaic_0001>

<llo_original>
// kernel: tpu_custom_call.1
$region0: #{tpu_custom_call.1}
  #allocation0 [shape = 'u32[]', space=smem, size = 0x4, offset = 0x4, fixed_abs, tag = 'smem constant byte address 0x4 - core index']
  #allocation1 [shape = 'u32[144,128]{1,0:T(1,128)}', space=vmem, size = 0x12000, scoped, tag = 'internal scratch']
  %s0 = inlined_call_operand.hbm [shape: bf16[1,32], index: 0, kind: input, shape index: {}]
  %s1 = inlined_call_operand.hbm [shape: bf16[32,384], index: 1, kind: input, shape index: {}]
  %s2 = inlined_call_operand.vmem [shape: f32[1,384], index: 2, kind: input, shape index: {}]
  %s3 = inlined_call_operand.hbm [shape: f32[1,384], index: 3, kind: output, shape index: {}]
  %s4 = sld [smem:[#allocation0]]
  $region53: #{tpu_custom_call.1} parent=0
    _
  %s6 = ssub.s32 1, %s4
  %s7 = scalar_select 0, %s6, %s4
  $region1: #{tpu_custom_call.1} parent=0
    #allocation2 [shape = 'u8[512]{0}', space=vmem, size = 0x400, scoped, tag = 'input window, operand 0, single buffered']
    #allocation3 [shape = 's32[2]{0}', space=sflag, size = 0x8, scoped, tag = 'scoped memory for tpu_custom_call.1']
    #allocation4 [shape = 's32[2]{0}', space=sflag, size = 0x8, scoped, tag = 'scoped memory for tpu_custom_call.1']
    #allocation5 [shape = 'u8[16384]{0}', space=vmem, size = 0x4000, scoped, tag = 'input window, operand 1']
    #allocation6 [shape = 's32[2]{0}', space=sflag, size = 0x8, scoped, tag = 'scoped memory for tpu_custom_call.1']
    #allocation7 [shape = 'u8[1024]{0}', space=vmem, size = 0x400, scoped, tag = 'output window, operand 0']
    %8 = vsyncpa [#allocation3], 0
    %9 = vsyncpa [#allocation6], 0
    %s10 = scalar_lea.sflag [#allocation6], 1
    %11 = vsyncpa %s10, 0
    %12 = vsyncpa [#allocation4], 0
    %s13 = scalar_lea.sflag [#allocation4], 1
    %14 = vsyncpa %s13, 0
    loop: start=0, step=1, limit=5
    $region2: #{tpu_custom_call.1} parent=1 // loop_pre_header
      _
    $region3: #{tpu_custom_call.1} parent=1 // loop_header
      %s16 = sphi 0, %s20
      %p17 = scmp.ge.s32.totalorder %s16, 5
      %s24 = sphi 0, %s24
      %s26 = sphi 0, %s24
      %s27 = sphi 0, %s26
      %s41 = sphi 0, %s27
      %s47 = sphi 0, %s49
      %s50 = sphi 0, %s47
      %s51 = sphi 0, %s50
      %s67 = sphi 0, %s51
      %s73 = sphi 0, %s75
      %s76 = sphi 0, %s73
      %s77 = sphi 0, %s76
      %s93 = sphi 0, %s77
      %s99 = sphi 0, %s101
      %s102 = sphi 0, %s99
      %s103 = sphi 0, %s102
      %s119 = sphi 0, %s103
    $region4: #{tpu_custom_call.1} parent=1 // loop_header_branch
      %19 = sbr.rel (%p17) target = $region8
    $region5: #{tpu_custom_call.1} parent=1 // loop_body
      %s21 = ssub.s32 %s16, 1
      %s22 = ssub.s32 %s16, 2
      %s23 = sadd.s32 %s16, 1
      %s25 = sadd.s32 %s24, 1
      %p28 = scmp.eq.s32.totalorder %s16, 2
      %p29 = scmp.ne.s32.totalorder %s24, %s26
      %p30 = scmp.eq.s32.totalorder %s16, 0
      %p31 = por %p29, %p30
      %p32 = scmp.ne.s32.totalorder %s24, %s26
      %p33 = scmp.eq.s32.totalorder %s21, 2
      %p34 = por %p32, %p33
      %p35 = scmp.ne.s32.totalorder %s26, %s27
      %p36 = scmp.eq.s32.totalorder %s21, 0
      %p37 = por %p35, %p36
      %p38 = scmp.ne.s32.totalorder %s26, %s27
      %p39 = scmp.eq.s32.totalorder %s22, 2
      %p40 = por %p38, %p39
      %p42 = scmp.ne.s32.totalorder %s27, %s41
      %p43 = scmp.eq.s32.totalorder %s22, 0
      %p44 = por %p42, %p43
      %s45 = ssub.s32 %s16, %s23
      %p46 = scmp.eq.s32.totalorder %s45, 0
      %s48 = sadd.s32 %s47, 1
      %s49 = scalar_select %p46, %s47, %s48
      %p52 = pneg %p46
      %p53 = scmp.eq.s32.totalorder %s16, 2
      %p54 = por %p52, %p53
      %p55 = scmp.ne.s32.totalorder %s47, %s50
      %p56 = scmp.eq.s32.totalorder %s16, 0
      %p57 = por %p55, %p56
      %p58 = scmp.ne.s32.totalorder %s47, %s50
      %p59 = scmp.eq.s32.totalorder %s21, 2
      %p60 = por %p58, %p59
      %p61 = scmp.ne.s32.totalorder %s50, %s51
      %p62 = scmp.eq.s32.totalorder %s21, 0
      %p63 = por %p61, %p62
      %p64 = scmp.ne.s32.totalorder %s50, %s51
      %p65 = scmp.eq.s32.totalorder %s22, 2
      %p66 = por %p64, %p65
      %p68 = scmp.ne.s32.totalorder %s51, %s67
      %p69 = scmp.eq.s32.totalorder %s22, 0
      %p70 = por %p68, %p69
      %s71 = ssub.s32 %s16, %s23
      %p72 = scmp.eq.s32.totalorder %s71, 0
      %s74 = sadd.s32 %s73, 1
      %s75 = scalar_select %p72, %s73, %s74
      %p78 = pneg %p72
      %p79 = scmp.eq.s32.totalorder %s16, 2
      %p80 = por %p78, %p79
      %p81 = scmp.ne.s32.totalorder %s73, %s76
      %p82 = scmp.eq.s32.totalorder %s16, 0
      %p83 = por %p81, %p82
      %p84 = scmp.ne.s32.totalorder %s73, %s76
      %p85 = scmp.eq.s32.totalorder %s21, 2
      %p86 = por %p84, %p85
      %p87 = scmp.ne.s32.totalorder %s76, %s77
      %p88 = scmp.eq.s32.totalorder %s21, 0
      %p89 = por %p87, %p88
      %p90 = scmp.ne.s32.totalorder %s76, %s77
      %p91 = scmp.eq.s32.totalorder %s22, 2
      %p92 = por %p90, %p91
      %p94 = scmp.ne.s32.totalorder %s77, %s93
      %p95 = scmp.eq.s32.totalorder %s22, 0
      %p96 = por %p94, %p95
      %s97 = ssub.s32 %s16, %s23
      %p98 = scmp.eq.s32.totalorder %s97, 0
      %s100 = sadd.s32 %s99, 1
      %s101 = scalar_select %p98, %s99, %s100
      %p104 = pneg %p98
      %p105 = scmp.eq.s32.totalorder %s16, 2
      %p106 = por %p104, %p105
      %p107 = scmp.ne.s32.totalorder %s99, %s102
      %p108 = scmp.eq.s32.totalorder %s16, 0
      %p109 = por %p107, %p108
      %p110 = scmp.ne.s32.totalorder %s99, %s102
      %p111 = scmp.eq.s32.totalorder %s21, 2
      %p112 = por %p110, %p111
      %p113 = scmp.ne.s32.totalorder %s102, %s103
      %p114 = scmp.eq.s32.totalorder %s21, 0
      %p115 = por %p113, %p114
      %p116 = scmp.ne.s32.totalorder %s102, %s103
      %p117 = scmp.eq.s32.totalorder %s22, 2
      %p118 = por %p116, %p117
      %p120 = scmp.ne.s32.totalorder %s103, %s119
      %p121 = scmp.eq.s32.totalorder %s22, 0
      %p122 = por %p120, %p121
      %p123 = scmp.le.s32.totalorder 1, %s16
      %p124 = scmp.lt.s32.totalorder %s16, 4
      %p125 = pnand %p123, %p124
      %p126 = pneg %p125
      // Predicated region
      $region9: #{tpu_custom_call.1} parent=5 // pred_check
        _
      $region10: #{tpu_custom_call.1} parent=5 // pred_check_branch
        %128 = sbr.rel (%p125) target = $region12
      $region11: #{tpu_custom_call.1} parent=5 // pred_region
        %s129 = ssub.s32 %s16, 1
        // Predicated region
        $region13: #{tpu_custom_call.1} parent=11 // pred_check
          %p130 = pneg %p37
        $region14: #{tpu_custom_call.1} parent=11 // pred_check_branch
          %132 = sbr.rel (%p130) target = $region16
        $region15: #{tpu_custom_call.1} parent=11 // pred_region
          %s134 = ssub.s32 16, 16
          %135 = vsyncadd [#allocation3], %s134
          %s137 = sshll.u32 [#allocation2], 4
          %s138 = int_to_ptr.vmem [resolvable:$true] %s137
          %140 = dma.hbm_to_vmem [thread:$0]  %s0, 16, %s138, [#allocation3]
        $region16: #{tpu_custom_call.1} parent=11 // pred_fallthru
          _
      $region12: #{tpu_custom_call.1} parent=5 // pred_fallthru
        _
      %p141 = scmp.lt.s32.totalorder %s16, 3
      // Predicated region
      $region17: #{tpu_custom_call.1} parent=5 // pred_check
        %p142 = pneg %p141
      $region18: #{tpu_custom_call.1} parent=5 // pred_check_branch
        %144 = sbr.rel (%p142) target = $region20
      $region19: #{tpu_custom_call.1} parent=5 // pred_region
        // Predicated region
        $region21: #{tpu_custom_call.1} parent=19 // pred_check
          %p145 = pneg %p57
        $region22: #{tpu_custom_call.1} parent=19 // pred_check_branch
          %147 = sbr.rel (%p145) target = $region24
        $region23: #{tpu_custom_call.1} parent=19 // pred_region
          %s148 = sand.u32 %s47, 1
          %s149 = scalar_lea.sflag [#allocation6], %s148
          %s150 = sand.u32 %s47, 1
          %s151 = smul.addr %s150, 16
          %s152 = scalar_lea.vmem [#allocation5], %s151
          %s154 = ssub.s32 256, 256
          %155 = vsyncadd %s149, %s154
          %s156 = smul.addr %s16, 64
          %s157 = scalar_lea.hbm %s1, %s156
          %s158 = sshll.u32 %s152, 4
          %s159 = int_to_ptr.vmem [resolvable:$true] %s158
          %164 = dma.hbm_to_vmem [thread:$0]  %s157, 256, %s159, %s149, 192, 64, 4
        $region24: #{tpu_custom_call.1} parent=19 // pred_fallthru
          _
        // Predicated region
        $region25: #{tpu_custom_call.1} parent=19 // pred_check
          %p165 = pneg %p83
        $region26: #{tpu_custom_call.1} parent=19 // pred_check_branch
          %167 = sbr.rel (%p165) target = $region28
        $region27: #{tpu_custom_call.1} parent=19 // pred_region
          %p168 = scmp.lt.s32.totalorder %s16, 2
          %s169 = scalar_select %p168, %s16, 2
          %s170 = scalar_lea.vmem %s2, %s169
        $region28: #{tpu_custom_call.1} parent=19 // pred_fallthru
          _
      $region20: #{tpu_custom_call.1} parent=5 // pred_fallthru
        _
      %p171 = scmp.le.s32.totalorder 1, %s16
      %p172 = scmp.lt.s32.totalorder %s16, 4
      %p173 = pnand %p171, %p172
      %p174 = pneg %p173
      // Predicated region
      $region29: #{tpu_custom_call.1} parent=5 // pred_check
        _
      $region30: #{tpu_custom_call.1} parent=5 // pred_check_branch
        %176 = sbr.rel (%p173) target = $region32
      $region31: #{tpu_custom_call.1} parent=5 // pred_region
        %s177 = ssub.s32 %s16, 1
        // Predicated region
        $region33: #{tpu_custom_call.1} parent=31 // pred_check
          %p178 = pneg %p37
        $region34: #{tpu_custom_call.1} parent=31 // pred_check_branch
          %180 = sbr.rel (%p178) target = $region36
        $region35: #{tpu_custom_call.1} parent=31 // pred_region
          %181 = dma.done [#allocation3], 16
        $region36: #{tpu_custom_call.1} parent=31 // pred_fallthru
          _
        %s182 = sand.u32 %s50, 1
        %s183 = scalar_lea.sflag [#allocation6], %s182
        %s184 = sand.u32 %s50, 1
        %s185 = smul.addr %s184, 16
        %s186 = scalar_lea.vmem [#allocation5], %s185
        // Predicated region
        $region37: #{tpu_custom_call.1} parent=31 // pred_check
          %p187 = pneg %p63
        $region38: #{tpu_custom_call.1} parent=31 // pred_check_branch
          %189 = sbr.rel (%p187) target = $region40
        $region39: #{tpu_custom_call.1} parent=31 // pred_region
          %190 = dma.done %s183, 256
        $region40: #{tpu_custom_call.1} parent=31 // pred_fallthru
          _
        %p191 = pneg %p37
        %p192 = pneg %p34
        %s193 = sand.u32 %s50, 1
        %s194 = scalar_lea.sflag [#allocation6], %s193
        %s195 = sand.u32 %s50, 1
        %s196 = smul.addr %s195, 16
        %s197 = scalar_lea.vmem [#allocation5], %s196
        %p198 = pneg %p63
        %p199 = pneg %p60
        %p200 = scmp.lt.s32.totalorder %s21, 2
        %s201 = scalar_select %p200, %s21, 2
        %s202 = scalar_lea.vmem %s2, %s201
        %p203 = pneg %p89
        %p204 = pneg %p86
        %p205 = pneg %p115
        %p206 = pneg %p112
        %s207 = sand.u32 %s102, 1
        %s208 = scalar_lea.sflag [#allocation4], %s207
        %s209 = sand.u32 %s102, 1
        %s210 = scalar_lea.vmem [#allocation7], %s209
        %p211 = scmp.lt.s32.totalorder %s21, 2
        %s212 = scalar_select %p211, %s21, 2
        %s213 = scalar_lea.vmem %s2, %s212
        %v215 = vld [vmem:[#allocation2] sm:$0x1]
        %v216 = vld [vmem:[%s186] sm:$0xf]
        %v217 = vld [vmem:[%s186 + $0x4] sm:$0xf]
        %v218 = vld [vmem:[%s186 + $0x8] sm:$0xf]
        %v219 = vld [vmem:[%s186 + $0xc] sm:$0xf]
        %v220 = vld [vmem:[%s213] sm:$0x1]
        %v225 = vunpack.c.l.b16 %v216
        %v226 = vunpack.c.l.b16 %v217
        %v227 = vunpack.c.l.b16 %v218
        %v228 = vunpack.c.l.b16 %v219
        %v229 = vpack.c.b16 %v226, %v225
        %v230 = vpack.c.b16 %v228, %v227
        %vm233 = vcmask 261120
        %v235 = vsel %vm233, %v215, 0
        %237 = vmatprep.subr.bf16.mxu0 0
        %238 = vmatpush1.bf16.msra.mxu0 %v229
        %239 = vmatprep.subr.bf16.mxu0 0
        %240 = vmatpush1.bf16.msra.mxu0 %v230
        %241 = vmatprep.subr.bf16.mxu0 0
        %242 = vmatpush1.bf16.msra.mxu0 0
        %243 = vmatprep.subr.bf16.mxu0 0
        %244 = vmatpush1.bf16.msra.mxu0 0
        %245 = vmatprep.subr.bf16.mxu0 0
        %246 = vmatpush1.bf16.msra.mxu0 0
        %247 = vmatprep.subr.bf16.mxu0 0
        %248 = vmatpush1.bf16.msra.mxu0 0
        %249 = vmatprep.subr.bf16.mxu0 0
        %250 = vmatpush1.bf16.msra.mxu0 0
        %251 = vmatprep.subr.bf16.mxu0 0
        %252 = vmatpush1.bf16.msra.mxu0 0
        %253 = vmatprep.subr.bf16.mxu0 0
        %254 = vmatpush1.bf16.msra.mxu0 0
        %255 = vmatprep.subr.bf16.mxu0 0
        %256 = vmatpush1.bf16.msra.mxu0 0
        %257 = vmatprep.subr.bf16.mxu0 0
        %258 = vmatpush1.bf16.msra.mxu0 0
        %259 = vmatprep.subr.bf16.mxu0 0
        %260 = vmatpush1.bf16.msra.mxu0 0
        %261 = vmatprep.subr.bf16.mxu0 0
        %262 = vmatpush1.bf16.msra.mxu0 0
        %263 = vmatprep.subr.bf16.mxu0 0
        %264 = vmatpush1.bf16.msra.mxu0 0
        %265 = vmatprep.subr.bf16.mxu0 0
        %266 = vmatpush1.bf16.msra.mxu0 0
        %267 = vmatprep.subr.bf16.mxu0 0
        %268 = vmatpush1.bf16.msra.mxu0 0
        %269 = vmatprep.mubr.bf16.mxu0 0
        %270 = vmatmul.mubr.bf16.gmra.mrb[0].mxu0 %v235
        %v271 = vpop.f32.mrb[0].mxu0
        %v272 = vadd.f32 %v220, %v271
        %v273 = vpop.f32.mrb[0].mxu0
        %v274 = vpop.f32.mrb[0].mxu0
        %v275 = vpop.f32.mrb[0].mxu0
        %276 = vdwg.mxu0
        %277 = vst [vmem:[%s210] sm:$0x1] %v272
        %s278 = sand.u32 %s102, 1
        %s279 = scalar_lea.sflag [#allocation4], %s278
        %s280 = sand.u32 %s102, 1
        %s281 = scalar_lea.vmem [#allocation7], %s280
        // Predicated region
        $region41: #{tpu_custom_call.1} parent=31 // pred_check
          %p282 = pneg %p112
        $region42: #{tpu_custom_call.1} parent=31 // pred_check_branch
          %284 = sbr.rel (%p282) target = $region44
        $region43: #{tpu_custom_call.1} parent=31 // pred_region
          %s286 = ssub.s32 16, 16
          %287 = vsyncadd %s279, %s286
          %s288 = smul.addr %s21, 16
          %s289 = scalar_lea.hbm %s3, %s288
          %s291 = sshll.u32 %s281, 4
          %s292 = int_to_ptr.vmem [resolvable:$true] %s291
          %294 = dma.vmem_to_hbm [thread:$0]  %s292, 16, %s289, %s279
        $region44: #{tpu_custom_call.1} parent=31 // pred_fallthru
          _
      $region32: #{tpu_custom_call.1} parent=5 // pred_fallthru
        _
      %p295 = scmp.le.s32.totalorder 2, %s16
      // Predicated region
      $region45: #{tpu_custom_call.1} parent=5 // pred_check
        %p296 = pneg %p295
      $region46: #{tpu_custom_call.1} parent=5 // pred_check_branch
        %298 = sbr.rel (%p296) target = $region48
      $region47: #{tpu_custom_call.1} parent=5 // pred_region
        %s299 = ssub.s32 %s16, 2
        // Predicated region
        $region49: #{tpu_custom_call.1} parent=47 // pred_check
          %p300 = pneg %p118
        $region50: #{tpu_custom_call.1} parent=47 // pred_check_branch
          %302 = sbr.rel (%p300) target = $region52
        $region51: #{tpu_custom_call.1} parent=47 // pred_region
          %s303 = sand.u32 %s103, 1
          %s304 = scalar_lea.sflag [#allocation4], %s303
          %s305 = sand.u32 %s103, 1
          %s306 = scalar_lea.vmem [#allocation7], %s305
          %307 = dma.done %s304, 16
        $region52: #{tpu_custom_call.1} parent=47 // pred_fallthru
          _
      $region48: #{tpu_custom_call.1} parent=5 // pred_fallthru
        _
    $region6: #{tpu_custom_call.1} parent=1 // loop_footer
      %s20 = sadd.s32 1, %s16
    $region7: #{tpu_custom_call.1} parent=1 // loop_footer_branch
      %15 = sbr.rel target = $region3
    $region8: #{tpu_custom_call.1} parent=1 // loop_exit
      _
    %308 = vsyncpa [#allocation3], 1
    %s309 = scalar_lea.sflag [#allocation3], 1
    %310 = vsyncpa %s309, 1
    %311 = vsyncpa [#allocation6], 1
    %s312 = scalar_lea.sflag [#allocation6], 1
    %313 = vsyncpa %s312, 1
    %314 = vsyncpa [#allocation4], 1
    %s315 = scalar_lea.sflag [#allocation4], 1
    %316 = vsyncpa %s315, 1

</llo_original>
